<compile_context>
chip_gen: v5e
topology: v5e:2x2
jax: 0.10.0
libtpu: 0.0.40
codegen_flags: <defaults>
</compile_context>

<pallas_src>
import jax
import jax.numpy as jnp
from jax.experimental import pallas as pl
from jax.experimental.pallas import tpu as pltpu

IN_DIM = 512          # fixed by nn.Parameter(torch.Tensor(512, hid_dim))
MASK_VALUE = -1e30


def _make_attention_kernel(nt):
    """Builds the kernel for a (batch_blocks, seq_blocks=nt) grid."""

    def kernel(x_ref, mask_ref, w_ref, b_ref, u_ref, o_ref):
        # x_ref:    (bt, tk, 512)  VMEM, x's native dtype (cast to MXU dtype here)
        # mask_ref: (bt, tk)       VMEM, f32
        # w_ref:    (512, H)       VMEM, compute dtype (resident)
        # b_ref:    (1, H)         VMEM, f32 (resident)
        # u_ref:    (1, H)         VMEM, f32 (resident)
        # o_ref:    (bt, T)        VMEM, f32 (resident across the seq-block axis)
        bt, tk, d = x_ref.shape
        h_dim = w_ref.shape[1]

        # Cast to the MXU compute dtype in VMEM (free VPU filler under a
        # mem-bound roofline); f32 accumulation via preferred_element_type.
        x2 = x_ref[...].reshape(bt * tk, d).astype(w_ref.dtype)
        h = jnp.tanh(
            jnp.dot(x2, w_ref[...], preferred_element_type=jnp.float32)
            + b_ref[...]
        )                                                        # (bt*tk, H) f32

        # Second projection (H -> 1) as broadcast-mul + lane reduce keeps the
        # logits lane-dense as a (bt, tk) slab.
        s = jnp.sum(h.reshape(bt, tk, h_dim) * u_ref[...], axis=-1)   # (bt, tk)

        # Arithmetic masking matches the PyTorch module for arbitrary float masks.
        m = mask_ref[...]
        logits = m * s + (1.0 - m) * MASK_VALUE

        def _softmax_store(vals):
            # Softmax over the sequence axis (last axis => lane reduction).
            # NOTE: a fully-masked row gives denom == 0 -> NaN, same as PyTorch.
            lmax = jnp.max(vals, axis=-1, keepdims=True)
            e = jnp.exp(vals - lmax)
            denom = jnp.sum(e, axis=-1, keepdims=True)
            o_ref[...] = e * pl.reciprocal(denom, approx=True)

        if nt == 1:
            _softmax_store(logits)
        else:
            # Stage this T-chunk's logits into the resident output block; run
            # the softmax once over the full (bt, T) slab on the last chunk.
            t_idx = pl.program_id(1)
            start = pl.multiple_of(t_idx * tk, 128)      # tk % 128 == 0 here
            o_ref[:, pl.ds(start, tk)] = logits

            @pl.when(t_idx == nt - 1)
            def _():
                _softmax_store(o_ref[...])

    return kernel


def _pick_vmem_limit():
    cap = 64 * 1024 * 1024
    try:
        info = pltpu.get_tpu_info()
        cap = int(getattr(info, "vmem_capacity_bytes", cap)) or cap
    except Exception:
        pass
    # Leave headroom under physical VMEM (v7x has only 64 MiB); 64 MiB is plenty
    # of scoped VMEM on v5e/v6e (128 MiB physical, 16/32 MiB scoped default).
    return min(64 * 1024 * 1024, (cap * 3) // 4)


def _choose_tiles(B, T, x_itemsize, x_target_bytes):
    """Returns (bt, tk): batch rows per block and sequence chunk per block."""
    D = IN_DIM
    row_bytes = T * D * x_itemsize
    min_bt = B if B < 8 else 8          # (bt, T) blocks need bt % 8 == 0 or bt == B

    rows = x_target_bytes // max(row_bytes, 1)
    if rows >= B:
        bt = B
    elif rows >= 8:
        bt = (rows // 8) * 8
    else:
        bt = min_bt                      # may exceed target; checked below

    # Keep >= 2 batch blocks when B is large enough so the "parallel" batch axis
    # can shard across both TensorCores on v7x (1 TC/chip on v5e/v6e: harmless).
    if B >= 16:
        half = -(-(-(-B // 2)) // 8) * 8   # ceil(ceil(B/2) / 8) * 8
        bt = min(bt, half)

    tk = T
    if bt * T * D * x_itemsize > x_target_bytes:
        # Large-T fallback: tile the sequence axis.  The (bt, tk) mask block
        # needs tk to be a multiple of 128 (lane rule) and tk must divide T so
        # the staged writes into the resident (bt, T) output block stay in-bounds.
        bt = min_bt
        max_tk = x_target_bytes // max(bt * D * x_itemsize, 1)
        tk = 0
        for cand in range((max_tk // 128) * 128, 0, -128):
            if T % cand == 0:
                tk = cand
                break
        if tk == 0:
            raise ValueError(
                f"Attention kernel: cannot tile T={T} within an x-tile budget of "
                f"{x_target_bytes} bytes (need a multiple-of-128 divisor of T). "
                "Pad T to a multiple of 128 or raise the VMEM budget.")
    return bt, tk


def attention_forward(x, mask, W, b, u, *, compute_dtype=jnp.bfloat16,
                      block_b=None, block_t=None):
    """x: (B, T, 512), mask: (B, T), W: (512, H), b: (H,), u: (H, 1).

    Returns softmax attention weights of shape (B, T, 1), f32.
    """
    B, T, D = x.shape
    H = W.shape[1]
    assert D == IN_DIM

    vmem_limit = _pick_vmem_limit()
    x_target_bytes = vmem_limit // 4
    x_itemsize = jnp.dtype(x.dtype).itemsize

    bt, tk = _choose_tiles(B, T, x_itemsize, x_target_bytes)
    if block_b is not None:
        bt = max(1, min(int(block_b), B))
        if bt < B:
            bt = max(8, (bt // 8) * 8)
    if block_t is not None:
        tk = max(1, min(int(block_t), T))
    assert T % tk == 0, "sequence block must divide T"

    nb = pl.cdiv(B, bt)
    nt = T // tk

    # Small / resident operands: cast on the host side (negligible traffic).
    wc = W.astype(compute_dtype)
    b2 = b.reshape(1, H).astype(jnp.float32)
    u2 = u.reshape(1, H).astype(jnp.float32)
    mask_f = mask.astype(jnp.float32)

    out = pl.pallas_call(
        _make_attention_kernel(nt),
        out_shape=jax.ShapeDtypeStruct((B, T), jnp.float32),
        grid=(nb, nt),
        in_specs=[
            pl.BlockSpec((bt, tk, D), lambda i, t: (i, t, 0)),  # x (native dtype)
            pl.BlockSpec((bt, tk), lambda i, t: (i, t)),        # mask
            pl.BlockSpec((D, H), lambda i, t: (0, 0)),          # W  (resident)
            pl.BlockSpec((1, H), lambda i, t: (0, 0)),          # b  (resident)
            pl.BlockSpec((1, H), lambda i, t: (0, 0)),          # u  (resident)
        ],
        out_specs=pl.BlockSpec((bt, T), lambda i, t: (i, 0)),   # resident over t
        compiler_params=pltpu.CompilerParams(
            dimension_semantics=("parallel", "arbitrary"),
            vmem_limit_bytes=vmem_limit,
        ),
    )(x, mask_f, wc, b2, u2)

    return out.reshape(B, T, 1)


def _reference(x, mask, W, b, u):
    attn = jnp.matmul(jnp.tanh(jnp.matmul(x, W) + b), u)     # (B, T, 1)
    m = mask[..., None]
    attn = m * attn + (1.0 - m) * MASK_VALUE
    return jax.nn.softmax(attn, axis=-2)


if __name__ == "__main__":
    key = jax.random.PRNGKey(0)
    kx, km, kw, ku, kx2, km2 = jax.random.split(key, 6)

    B, T, H = 2, 8, 32
    x = jax.random.normal(kx, (B, T, IN_DIM), dtype=jnp.float32)

    # Binary mask with a few zeroed-out (padded) positions; guarantee at least
    # one valid position per row (fully-masked rows are NaN, as in PyTorch).
    mask = (jax.random.uniform(km, (B, T)) > 0.25).astype(jnp.float32)
    mask = mask.at[:, 0].set(1.0)

    # Deterministic xavier_uniform-style init (matches nn.init.xavier_uniform_).
    bound_W = (6.0 / (IN_DIM + H)) ** 0.5
    W = jax.random.uniform(kw, (IN_DIM, H), jnp.float32, -bound_W, bound_W)
    b = jnp.zeros((H,), jnp.float32)
    bound_u = (6.0 / (H + 1)) ** 0.5
    u = jax.random.uniform(ku, (H, 1), jnp.float32, -bound_u, bound_u)

    ref = _reference(x, mask, W, b, u)

    # 1) f32 compute path (only the approx softmax reciprocal differs from ref).
    out_f32 = jax.block_until_ready(
        attention_forward(x, mask, W, b, u, compute_dtype=jnp.float32)
    )
    assert out_f32.shape == (B, T, 1)
    assert jnp.allclose(out_f32, ref, atol=5e-3, rtol=5e-3), "f32 mismatch vs ref"

    # 2) Optimized default path: f32 x streamed, bf16 MXU, f32 accumulation.
    out_bf16 = jax.block_until_ready(attention_forward(x, mask, W, b, u))
    assert out_bf16.shape == (B, T, 1)
    assert jnp.allclose(out_bf16, ref, atol=2e-2, rtol=2e-2), "bf16 mismatch vs ref"

    # 3) Multi-block batch path (B >= 16 -> >= 2 grid blocks for v7x 2-TC sharding).
    B2, T2 = 16, 128
    x2 = jax.random.normal(kx2, (B2, T2, IN_DIM), dtype=jnp.float32)
    mask2 = (jax.random.uniform(km2, (B2, T2)) > 0.25).astype(jnp.float32)
    mask2 = mask2.at[:, 0].set(1.0)
    ref2 = _reference(x2, mask2, W, b, u)
    out2 = jax.block_until_ready(attention_forward(x2, mask2, W, b, u))
    assert out2.shape == (B2, T2, 1)
    assert jnp.allclose(out2, ref2, atol=2e-2, rtol=2e-2), "multi-block mismatch"

    print("KERNEL_OK")
</pallas_src>

<mosaic_0001>
module attributes {stable_mosaic.version = 11 : i64} {
  func.func @kernel(%arg0: i32, %arg1: i32, %arg2: memref<2x8x512xf32, #tpu.memory_space<vmem>>, %arg3: memref<2x8xf32, #tpu.memory_space<vmem>>, %arg4: memref<512x32xf32, #tpu.memory_space<vmem>>, %arg5: memref<1x32xf32, #tpu.memory_space<vmem>>, %arg6: memref<1x32xf32, #tpu.memory_space<vmem>>, %arg7: memref<2x8xf32, #tpu.memory_space<vmem>>) attributes {dimension_semantics = [#tpu.dimension_semantics<parallel>, #tpu.dimension_semantics<arbitrary>], iteration_bounds = array<i64: 1, 1>, scalar_prefetch = 0 : i64, scratch_operands = 0 : i64, tpu.core_type = #tpu.core_type<tc>, window_params = [{transform_indices = @transform_0, window_bounds = array<i64: 2, 8, 512>}, {transform_indices = @transform_1, window_bounds = array<i64: 2, 8>}, {pipeline_mode = #tpu.pipeline_mode<synchronous>, transform_indices = @transform_2, window_bounds = array<i64: 512, 32>}, {pipeline_mode = #tpu.pipeline_mode<synchronous>, transform_indices = @transform_3, window_bounds = array<i64: 1, 32>}, {pipeline_mode = #tpu.pipeline_mode<synchronous>, transform_indices = @transform_4, window_bounds = array<i64: 1, 32>}, {transform_indices = @transform_5, window_bounds = array<i64: 2, 8>}]} {
    %c0 = arith.constant 0 : index
    %c0_0 = arith.constant 0 : index
    %c0_1 = arith.constant 0 : index
    %0 = vector.load %arg2[%c0, %c0_0, %c0_1] : memref<2x8x512xf32, #tpu.memory_space<vmem>>, vector<2x8x512xf32>
    %1 = vector.shape_cast %0 : vector<2x8x512xf32> to vector<16x512xf32>
    %c0_2 = arith.constant 0 : index
    %c0_3 = arith.constant 0 : index
    %2 = vector.load %arg4[%c0_2, %c0_3] : memref<512x32xf32, #tpu.memory_space<vmem>>, vector<512x32xf32>
    %cst = arith.constant dense<0.000000e+00> : vector<16x32xf32>
    %3 = tpu.matmul %1, %2, %cst {dimension_numbers = #tpu.dot_dimension_numbers<[1], [0], [0], [1], [0, 0, 1, 1], [], []>} : vector<16x512xf32>, vector<512x32xf32>, vector<16x32xf32> -> vector<16x32xf32>
    %c0_4 = arith.constant 0 : index
    %c0_5 = arith.constant 0 : index
    %4 = vector.load %arg5[%c0_4, %c0_5] : memref<1x32xf32, #tpu.memory_space<vmem>>, vector<1x32xf32>
    %5 = vector.broadcast %4 : vector<1x32xf32> to vector<16x32xf32>
    %6 = arith.addf %3, %5 : vector<16x32xf32>
    %7 = math.tanh %6 : vector<16x32xf32>
    %8 = vector.shape_cast %7 : vector<16x32xf32> to vector<2x8x32xf32>
    %c0_6 = arith.constant 0 : index
    %c0_7 = arith.constant 0 : index
    %9 = vector.load %arg6[%c0_6, %c0_7] : memref<1x32xf32, #tpu.memory_space<vmem>>, vector<1x32xf32>
    %10 = vector.shape_cast %9 : vector<1x32xf32> to vector<1x1x32xf32>
    %11 = vector.broadcast %10 : vector<1x1x32xf32> to vector<2x8x32xf32>
    %12 = arith.mulf %8, %11 : vector<2x8x32xf32>
    %cst_8 = arith.constant dense<0.000000e+00> : vector<2x8xf32>
    %13 = vector.multi_reduction <add>, %12, %cst_8 [2] : vector<2x8x32xf32> to vector<2x8xf32>
    %c0_9 = arith.constant 0 : index
    %c0_10 = arith.constant 0 : index
    %14 = vector.load %arg3[%c0_9, %c0_10] : memref<2x8xf32, #tpu.memory_space<vmem>>, vector<2x8xf32>
    %15 = arith.mulf %14, %13 : vector<2x8xf32>
    %cst_11 = arith.constant 1.000000e+00 : f32
    %16 = vector.broadcast %cst_11 : f32 to vector<2x8xf32>
    %17 = arith.subf %16, %14 : vector<2x8xf32>
    %cst_12 = arith.constant -1.000000e+30 : f32
    %18 = vector.broadcast %cst_12 : f32 to vector<2x8xf32>
    %19 = arith.mulf %17, %18 : vector<2x8xf32>
    %20 = arith.addf %15, %19 : vector<2x8xf32>
    %cst_13 = arith.constant dense<0xFF800000> : vector<2xf32>
    %21 = vector.multi_reduction <maximumf>, %20, %cst_13 [1] : vector<2x8xf32> to vector<2xf32>
    %22 = vector.shape_cast %21 : vector<2xf32> to vector<2x1xf32>
    %23 = vector.broadcast %22 : vector<2x1xf32> to vector<2x8xf32>
    %24 = arith.subf %20, %23 : vector<2x8xf32>
    %25 = math.exp %24 : vector<2x8xf32>
    %cst_14 = arith.constant dense<0.000000e+00> : vector<2xf32>
    %26 = vector.multi_reduction <add>, %25, %cst_14 [1] : vector<2x8xf32> to vector<2xf32>
    %27 = vector.shape_cast %26 : vector<2xf32> to vector<2x1xf32>
    %28 = tpu.reciprocal %27 {approx = true} : vector<2x1xf32> -> vector<2x1xf32>
    %29 = vector.broadcast %28 : vector<2x1xf32> to vector<2x8xf32>
    %30 = arith.mulf %25, %29 : vector<2x8xf32>
    %c0_15 = arith.constant 0 : index
    %c0_16 = arith.constant 0 : index
    %31 = vector.load %arg7[%c0_15, %c0_16] : memref<2x8xf32, #tpu.memory_space<vmem>>, vector<2x8xf32>
    tpu.vector_store %arg7[%c0_15, %c0_16], %30 {strides = array<i32>} : memref<2x8xf32, #tpu.memory_space<vmem>>, vector<2x8xf32>,
    return
  }
  func.func @transform_0(%arg0: i32, %arg1: i32) -> (i32, i32, i32) {
    %c0_i32 = arith.constant 0 : i32
    %c0_i32_0 = arith.constant 0 : i32
    return %arg0, %arg1, %c0_i32 : i32, i32, i32
  }
  func.func @transform_1(%arg0: i32, %arg1: i32) -> (i32, i32) {
    %c0_i32 = arith.constant 0 : i32
    return %arg0, %arg1 : i32, i32
  }
  func.func @transform_2(%arg0: i32, %arg1: i32) -> (i32, i32) {
    %c0_i32 = arith.constant 0 : i32
    %c0_i32_0 = arith.constant 0 : i32
    %c0_i32_1 = arith.constant 0 : i32
    return %c0_i32, %c0_i32_0 : i32, i32
  }
  func.func @transform_3(%arg0: i32, %arg1: i32) -> (i32, i32) {
    %c0_i32 = arith.constant 0 : i32
    %c0_i32_0 = arith.constant 0 : i32
    %c0_i32_1 = arith.constant 0 : i32
    return %c0_i32, %c0_i32_0 : i32, i32
  }
  func.func @transform_4(%arg0: i32, %arg1: i32) -> (i32, i32) {
    %c0_i32 = arith.constant 0 : i32
    %c0_i32_0 = arith.constant 0 : i32
    %c0_i32_1 = arith.constant 0 : i32
    return %c0_i32, %c0_i32_0 : i32, i32
  }
  func.func @transform_5(%arg0: i32, %arg1: i32) -> (i32, i32) {
    %c0_i32 = arith.constant 0 : i32
    %c0_i32_0 = arith.constant 0 : i32
    return %arg0, %c0_i32 : i32, i32
  }
}

</mosaic_0001>

<llo_original>
// kernel: tpu_custom_call.1
$region0: #{tpu_custom_call.1}
  #allocation0 [shape = 'u32[]', space=smem, size = 0x4, offset = 0x4, fixed_abs, tag = 'smem constant byte address 0x4 - core index']
  #allocation1 [shape = 'u32[72,128]{1,0:T(1,128)}', space=vmem, size = 0x9000, scoped, tag = 'internal scratch']
  %s0 = inlined_call_operand.vmem [shape: f32[2,8,512], index: 0, kind: input, shape index: {}]
  %s1 = inlined_call_operand.vmem [shape: f32[2,8], index: 1, kind: input, shape index: {}]
  %s2 = inlined_call_operand.vmem [shape: f32[512,32], index: 2, kind: input, shape index: {}]
  %s3 = inlined_call_operand.vmem [shape: f32[1,32], index: 3, kind: input, shape index: {}]
  %s4 = inlined_call_operand.vmem [shape: f32[1,32], index: 4, kind: input, shape index: {}]
  %s5 = inlined_call_operand.hbm [shape: f32[2,8], index: 5, kind: output, shape index: {}]
  %s6 = sld [smem:[#allocation0]]
  $region30: #{tpu_custom_call.1} parent=0
    _
  %s8 = ssub.s32 1, %s6
  %s9 = scalar_select 0, %s8, %s6
  $region1: #{tpu_custom_call.1} parent=0
    #allocation2 [shape = 'u8[1024]{0}', space=vmem, size = 0x400, scoped, tag = 'output window, operand 0, single buffered']
    #allocation3 [shape = 's32[1]{0}', space=sflag, size = 0x4, scoped, tag = 'scoped memory for tpu_custom_call.1']
    %10 = vsyncpa [#allocation3], 0
    // Predicated region
    $region2: #{tpu_custom_call.1} parent=1 // pred_check
      _
    $region3: #{tpu_custom_call.1} parent=1 // pred_check_branch
      %12 = sbr.rel (0) target = $region5
    $region4: #{tpu_custom_call.1} parent=1 // pred_region
      _
    $region5: #{tpu_custom_call.1} parent=1 // pred_fallthru
      _
    // Predicated region
    $region6: #{tpu_custom_call.1} parent=1 // pred_check
      _
    $region7: #{tpu_custom_call.1} parent=1 // pred_check_branch
      %14 = sbr.rel (0) target = $region9
    $region8: #{tpu_custom_call.1} parent=1 // pred_region
      _
    $region9: #{tpu_custom_call.1} parent=1 // pred_fallthru
      _
    // Predicated region
    $region10: #{tpu_custom_call.1} parent=1 // pred_check
      _
    $region11: #{tpu_custom_call.1} parent=1 // pred_check_branch
      %16 = sbr.rel (0) target = $region13
    $region12: #{tpu_custom_call.1} parent=1 // pred_region
      _
    $region13: #{tpu_custom_call.1} parent=1 // pred_fallthru
      _
    // Predicated region
    $region14: #{tpu_custom_call.1} parent=1 // pred_check
      _
    $region15: #{tpu_custom_call.1} parent=1 // pred_check_branch
      %18 = sbr.rel (0) target = $region17
    $region16: #{tpu_custom_call.1} parent=1 // pred_region
      _
    $region17: #{tpu_custom_call.1} parent=1 // pred_fallthru
      _
    // Predicated region
    $region18: #{tpu_custom_call.1} parent=1 // pred_check
      _
    $region19: #{tpu_custom_call.1} parent=1 // pred_check_branch
      %20 = sbr.rel (0) target = $region21
    $region20: #{tpu_custom_call.1} parent=1 // pred_region
      _
    $region21: #{tpu_custom_call.1} parent=1 // pred_fallthru
      _
    %v21 = vld [vmem:[%s0] sm:$0xff]
    %v22 = vld [vmem:[%s0 + $0x8] sm:$0xff]
    %v23 = vld [vmem:[%s0 + $0x10] sm:$0xff]
    %v24 = vld [vmem:[%s0 + $0x18] sm:$0xff]
    %v25 = vld [vmem:[%s0 + $0x20] sm:$0xff]
    %v26 = vld [vmem:[%s0 + $0x28] sm:$0xff]
    %v27 = vld [vmem:[%s0 + $0x30] sm:$0xff]
    %v28 = vld [vmem:[%s0 + $0x38] sm:$0xff]
    %v29 = vld [vmem:[%s2] sm:$0xff]
    %v30 = vld [vmem:[%s2 + $0x8] sm:$0xff]
    %v31 = vld [vmem:[%s2 + $0x10] sm:$0xff]
    %v32 = vld [vmem:[%s2 + $0x18] sm:$0xff]
    %v33 = vld [vmem:[%s2 + $0x20] sm:$0xff]
    %v34 = vld [vmem:[%s2 + $0x28] sm:$0xff]
    %v35 = vld [vmem:[%s2 + $0x30] sm:$0xff]
    %v36 = vld [vmem:[%s2 + $0x38] sm:$0xff]
    %v37 = vld [vmem:[%s2 + $0x40] sm:$0xff]
    %v38 = vld [vmem:[%s2 + $0x48] sm:$0xff]
    %v39 = vld [vmem:[%s2 + $0x50] sm:$0xff]
    %v40 = vld [vmem:[%s2 + $0x58] sm:$0xff]
    %v41 = vld [vmem:[%s2 + $0x60] sm:$0xff]
    %v42 = vld [vmem:[%s2 + $0x68] sm:$0xff]
    %v43 = vld [vmem:[%s2 + $0x70] sm:$0xff]
    %v44 = vld [vmem:[%s2 + $0x78] sm:$0xff]
    %v45 = vld [vmem:[%s2 + $0x80] sm:$0xff]
    %v46 = vld [vmem:[%s2 + $0x88] sm:$0xff]
    %v47 = vld [vmem:[%s2 + $0x90] sm:$0xff]
    %v48 = vld [vmem:[%s2 + $0x98] sm:$0xff]
    %v49 = vld [vmem:[%s2 + $0xa0] sm:$0xff]
    %v50 = vld [vmem:[%s2 + $0xa8] sm:$0xff]
    %v51 = vld [vmem:[%s2 + $0xb0] sm:$0xff]
    %v52 = vld [vmem:[%s2 + $0xb8] sm:$0xff]
    %v53 = vld [vmem:[%s2 + $0xc0] sm:$0xff]
    %v54 = vld [vmem:[%s2 + $0xc8] sm:$0xff]
    %v55 = vld [vmem:[%s2 + $0xd0] sm:$0xff]
    %v56 = vld [vmem:[%s2 + $0xd8] sm:$0xff]
    %v57 = vld [vmem:[%s2 + $0xe0] sm:$0xff]
    %v58 = vld [vmem:[%s2 + $0xe8] sm:$0xff]
    %v59 = vld [vmem:[%s2 + $0xf0] sm:$0xff]
    %v60 = vld [vmem:[%s2 + $0xf8] sm:$0xff]
    %v61 = vld [vmem:[%s2 + $0x100] sm:$0xff]
    %v62 = vld [vmem:[%s2 + $0x108] sm:$0xff]
    %v63 = vld [vmem:[%s2 + $0x110] sm:$0xff]
    %v64 = vld [vmem:[%s2 + $0x118] sm:$0xff]
    %v65 = vld [vmem:[%s2 + $0x120] sm:$0xff]
    %v66 = vld [vmem:[%s2 + $0x128] sm:$0xff]
    %v67 = vld [vmem:[%s2 + $0x130] sm:$0xff]
    %v68 = vld [vmem:[%s2 + $0x138] sm:$0xff]
    %v69 = vld [vmem:[%s2 + $0x140] sm:$0xff]
    %v70 = vld [vmem:[%s2 + $0x148] sm:$0xff]
    %v71 = vld [vmem:[%s2 + $0x150] sm:$0xff]
    %v72 = vld [vmem:[%s2 + $0x158] sm:$0xff]
    %v73 = vld [vmem:[%s2 + $0x160] sm:$0xff]
    %v74 = vld [vmem:[%s2 + $0x168] sm:$0xff]
    %v75 = vld [vmem:[%s2 + $0x170] sm:$0xff]
    %v76 = vld [vmem:[%s2 + $0x178] sm:$0xff]
    %v77 = vld [vmem:[%s2 + $0x180] sm:$0xff]
    %v78 = vld [vmem:[%s2 + $0x188] sm:$0xff]
    %v79 = vld [vmem:[%s2 + $0x190] sm:$0xff]
    %v80 = vld [vmem:[%s2 + $0x198] sm:$0xff]
    %v81 = vld [vmem:[%s2 + $0x1a0] sm:$0xff]
    %v82 = vld [vmem:[%s2 + $0x1a8] sm:$0xff]
    %v83 = vld [vmem:[%s2 + $0x1b0] sm:$0xff]
    %v84 = vld [vmem:[%s2 + $0x1b8] sm:$0xff]
    %v85 = vld [vmem:[%s2 + $0x1c0] sm:$0xff]
    %v86 = vld [vmem:[%s2 + $0x1c8] sm:$0xff]
    %v87 = vld [vmem:[%s2 + $0x1d0] sm:$0xff]
    %v88 = vld [vmem:[%s2 + $0x1d8] sm:$0xff]
    %v89 = vld [vmem:[%s2 + $0x1e0] sm:$0xff]
    %v90 = vld [vmem:[%s2 + $0x1e8] sm:$0xff]
    %v91 = vld [vmem:[%s2 + $0x1f0] sm:$0xff]
    %v92 = vld [vmem:[%s2 + $0x1f8] sm:$0xff]
    %v93 = vld [vmem:[%s3] sm:$0x1]
    %v95 = vperm.slane %v93, 0
    %97 = vmatpush.msra.mxu0 %v44
    %98 = vmatpush.msra.mxu0 %v43
    %99 = vmatpush.msra.mxu0 %v42
    %100 = vmatpush.msra.mxu0 %v41
    %101 = vmatpush.msra.mxu0 %v40
    %102 = vmatpush.msra.mxu0 %v39
    %103 = vmatpush.msra.mxu0 %v38
    %104 = vmatpush.msra.mxu0 %v37
    %105 = vmatpush.msra.mxu0 %v36
    %106 = vmatpush.msra.mxu0 %v35
    %107 = vmatpush.msra.mxu0 %v34
    %108 = vmatpush.msra.mxu0 %v33
    %109 = vmatpush.msra.mxu0 %v32
    %110 = vmatpush.msra.mxu0 %v31
    %111 = vmatpush.msra.mxu0 %v30
    %112 = vmatpush.msra.mxu0 %v29
    %113 = vmatmul.f32.gmra.mxu0 %v21
    %v114 = vpop.f32.mrf.mxu0
    %v115 = vadd.f32 %v95, %v114
    %116 = vmatmul.f32.gmra.mxu0 %v25
    %v117 = vpop.f32.mrf.mxu0
    %v118 = vadd.f32 %v95, %v117
    %119 = vdwg.mxu0
    %120 = vmatpush.msra.mxu0 %v60
    %121 = vmatpush.msra.mxu0 %v59
    %122 = vmatpush.msra.mxu0 %v58
    %123 = vmatpush.msra.mxu0 %v57
    %124 = vmatpush.msra.mxu0 %v56
    %125 = vmatpush.msra.mxu0 %v55
    %126 = vmatpush.msra.mxu0 %v54
    %127 = vmatpush.msra.mxu0 %v53
    %128 = vmatpush.msra.mxu0 %v52
    %129 = vmatpush.msra.mxu0 %v51
    %130 = vmatpush.msra.mxu0 %v50
    %131 = vmatpush.msra.mxu0 %v49
    %132 = vmatpush.msra.mxu0 %v48
    %133 = vmatpush.msra.mxu0 %v47
    %134 = vmatpush.msra.mxu0 %v46
    %135 = vmatpush.msra.mxu0 %v45
    %136 = vmatmul.f32.gmra.mxu0 %v22
    %v137 = vpop.f32.mrf.mxu0
    %v138 = vadd.f32 %v115, %v137
    %139 = vmatmul.f32.gmra.mxu0 %v26
    %v140 = vpop.f32.mrf.mxu0
    %v141 = vadd.f32 %v118, %v140
    %142 = vdwg.mxu0
    %143 = vmatpush.msra.mxu0 %v76
    %144 = vmatpush.msra.mxu0 %v75
    %145 = vmatpush.msra.mxu0 %v74
    %146 = vmatpush.msra.mxu0 %v73
    %147 = vmatpush.msra.mxu0 %v72
    %148 = vmatpush.msra.mxu0 %v71
    %149 = vmatpush.msra.mxu0 %v70
    %150 = vmatpush.msra.mxu0 %v69
    %151 = vmatpush.msra.mxu0 %v68
    %152 = vmatpush.msra.mxu0 %v67
    %153 = vmatpush.msra.mxu0 %v66
    %154 = vmatpush.msra.mxu0 %v65
    %155 = vmatpush.msra.mxu0 %v64
    %156 = vmatpush.msra.mxu0 %v63
    %157 = vmatpush.msra.mxu0 %v62
    %158 = vmatpush.msra.mxu0 %v61
    %159 = vmatmul.f32.gmra.mxu0 %v23
    %v160 = vpop.f32.mrf.mxu0
    %v161 = vadd.f32 %v138, %v160
    %162 = vmatmul.f32.gmra.mxu0 %v27
    %v163 = vpop.f32.mrf.mxu0
    %v164 = vadd.f32 %v141, %v163
    %165 = vdwg.mxu0
    %166 = vmatpush.msra.mxu0 %v92
    %167 = vmatpush.msra.mxu0 %v91
    %168 = vmatpush.msra.mxu0 %v90
    %169 = vmatpush.msra.mxu0 %v89
    %170 = vmatpush.msra.mxu0 %v88
    %171 = vmatpush.msra.mxu0 %v87
    %172 = vmatpush.msra.mxu0 %v86
    %173 = vmatpush.msra.mxu0 %v85
    %174 = vmatpush.msra.mxu0 %v84
    %175 = vmatpush.msra.mxu0 %v83
    %176 = vmatpush.msra.mxu0 %v82
    %177 = vmatpush.msra.mxu0 %v81
    %178 = vmatpush.msra.mxu0 %v80
    %179 = vmatpush.msra.mxu0 %v79
    %180 = vmatpush.msra.mxu0 %v78
    %181 = vmatpush.msra.mxu0 %v77
    %182 = vmatmul.f32.gmra.mxu0 %v24
    %v183 = vpop.f32.mrf.mxu0
    %v184 = vadd.f32 %v161, %v183
    %185 = vmatmul.f32.gmra.mxu0 %v28
    %v186 = vpop.f32.mrf.mxu0
    %v187 = vadd.f32 %v164, %v186
    %188 = vdwg.mxu0
    %v189 = vtanh.pop %v184
    %v190 = vtanh.pop %v187
    %v191 = vld [vmem:[%s4] sm:$0x1]
    %v193 = vperm.slane %v191, 0
    %v195 = vmul.f32 %v189, %v193
    %v196 = vmul.f32 %v190, %v193
    %vm197 = vcmask 261120
    %v198 = vsel %vm197, %v195, 0.0
    %199 = vadd.xlane.f32.xlu0 %v198
    %v200 = vpop.xlane.xlu0 %199
    %v201 = vsel %vm197, %v196, 0.0
    %202 = vadd.xlane.f32.xlu0 %v201
    %v203 = vpop.xlane.xlu0 %202
    %v204 = vld [vmem:[%s1] sm:$0x3]
    %v207 = vlaneseq
    %v208 = vand.u32 %v207, 127
    %v209 = vperm.slane %v200, %v208
    %v210 = vperm.slane %v203, %v208
    %vm211 = vcmask 1041409
    %v212 = vsel %vm211, %v210, %v209
    %v214 = vmul.f32 %v204, %v212
    %v215 = vsub.f32 1.0, %v204
    %v216 = vmul.f32 %v215, -1e+30
    %v217 = vadd.f32 %v214, %v216
    %vm218 = vcmask 58368
    %v219 = vsel %vm218, %v217, -inf
    %220 = vmax.xlane.f32.xlu0 %v219
    %v221 = vpop.xlane.xlu0 %220
    %v222 = vsub.f32 %v217, %v221
    %v223 = vmul.f32 %v222, 1.442695
    %v224 = vpow.pop %v223
    %v225 = vsel %vm218, %v224, 0.0
    %226 = vadd.xlane.f32.xlu0 %v225
    %v227 = vpop.xlane.xlu0 %226
    %v228 = vrcp.pop %v227
    %v229 = vmul.f32 %v224, %v228
    %230 = vst.msk [vmem:[#allocation2] sm:$0x3] %vm218, %v229
    // Predicated region
    $region22: #{tpu_custom_call.1} parent=1 // pred_check
      _
    $region23: #{tpu_custom_call.1} parent=1 // pred_check_branch
      %232 = sbr.rel (0) target = $region25
    $region24: #{tpu_custom_call.1} parent=1 // pred_region
      %234 = vsyncadd [#allocation3], 0
      %s236 = sshll.u32 [#allocation2], 4
      %s237 = int_to_ptr.vmem [resolvable:$true] %s236
      %s238 = sshll.u32 %s5, 4
      %s239 = int_to_ptr.hbm [resolvable:$true] %s238
      %241 = dma.vmem_to_hbm [thread:$0]  %s237, 32, %s239, [#allocation3]
    $region25: #{tpu_custom_call.1} parent=1 // pred_fallthru
      _
    // Predicated region
    $region26: #{tpu_custom_call.1} parent=1 // pred_check
      _
    $region27: #{tpu_custom_call.1} parent=1 // pred_check_branch
      %243 = sbr.rel (0) target = $region29
    $region28: #{tpu_custom_call.1} parent=1 // pred_region
      %245 = dma.done [#allocation3], 32
    $region29: #{tpu_custom_call.1} parent=1 // pred_fallthru
      _
    %246 = vsyncpa [#allocation3], 1

</llo_original>
